<compile_context>
chip_gen: v7x
topology: tpu7x:2x2x1
jax: 0.10.0
libtpu: 0.0.40
codegen_flags: <defaults>
</compile_context>

<pallas_src>
import functools
import math

import jax
import jax.numpy as jnp
from jax.experimental import pallas as pl
from jax.experimental.pallas import tpu as pltpu

# Plain Python float (becomes a literal in the kernel jaxpr, never a captured const).
# Finite fill: fully-masked rows give a uniform average of V instead of NaN
# (intentional, documented divergence from torch's -inf + softmax behavior).
_MASK_FILL = -1e30
# 48 MiB: below v7x's 64 MiB physical VMEM per TC, comfortable on v5e/v6e (128 MiB).
_VMEM_LIMIT = 48 * 1024 * 1024


def _pick_tile(n, target, align):
    """Largest tile <= target that divides n and is a multiple of `align`;
    falls back to the full dimension if no such tile exists (or n is small)."""
    if n <= target:
        return n
    t = (target // align) * align
    while t >= align:
        if n % t == 0:
            return t
        t -= align
    return n


# ------------------------------------------------------------------
# Linear projection kernel: y = x @ W_t + b, W_t pre-transposed to (d_in, d_out).
# Row-tiled and d_out-tiled; bf16 operands, f32 accumulation on the MXU.
# ------------------------------------------------------------------
def _linear_kernel(x_ref, w_ref, b_ref, o_ref):
    # x: (tm, d_in) bf16, w: (d_in, tn) bf16, b: (1, tn) f32
    y = jnp.dot(x_ref[...], w_ref[...], preferred_element_type=jnp.float32)
    o_ref[...] = (y + b_ref[...]).astype(o_ref.dtype)


def pallas_linear(x, w_t, b, out_dtype):
    """x: (M, d_in) bf16, w_t: (d_in, d_out) bf16, b: (d_out,) f32 -> (M, d_out)."""
    M, d_in = x.shape
    d_out = w_t.shape[1]
    tm = _pick_tile(M, 512, 8)
    tn = _pick_tile(d_out, 512, 128)
    b2 = b.reshape(1, d_out).astype(jnp.float32)
    cost = pl.CostEstimate(
        flops=2 * M * d_in * d_out,
        transcendentals=0,
        bytes_accessed=2 * (M * d_in + d_in * d_out + M * d_out) + 4 * d_out)
    return pl.pallas_call(
        _linear_kernel,
        out_shape=jax.ShapeDtypeStruct((M, d_out), out_dtype),
        grid=(pl.cdiv(M, tm), pl.cdiv(d_out, tn)),
        in_specs=[
            pl.BlockSpec((tm, d_in), lambda i, j: (i, 0)),
            pl.BlockSpec((d_in, tn), lambda i, j: (0, j)),
            pl.BlockSpec((1, tn), lambda i, j: (0, j)),
        ],
        out_specs=pl.BlockSpec((tm, tn), lambda i, j: (i, j)),
        compiler_params=pltpu.CompilerParams(
            dimension_semantics=("parallel", "parallel"),
            vmem_limit_bytes=_VMEM_LIMIT),
        cost_estimate=cost,
    )(x, w_t, b2)


# ------------------------------------------------------------------
# Flash-style fused attention. One (batch, q-tile) owns the kv loop (innermost,
# "arbitrary") with online softmax. Q/K/V are lane-dense (B, n, h*d); heads are
# static lane-dim slices inside the kernel.
# ------------------------------------------------------------------
def _attn_kernel(q_ref, k_ref, v_ref, m_ref, o_ref, acc_ref, m_sc, l_sc,
                 *, h, d_k, d_v):
    # q_ref: (1, tq, h*d_k) bf16  k_ref: (1, tk, h*d_k) bf16  v_ref: (1, tk, h*d_v) bf16
    # m_ref: (1, tq, tk) int8     o_ref: (1, tq, h*d_v) bf16
    # acc_ref: (tq, h*d_v) f32    m_sc / l_sc: (h, tq, 1) f32   (persist across kv steps)
    kv = pl.program_id(2)

    @pl.when(kv == 0)
    def _init():
        m_sc[...] = jnp.full_like(m_sc, _MASK_FILL)
        l_sc[...] = jnp.zeros_like(l_sc)
        acc_ref[...] = jnp.zeros_like(acc_ref)

    # Head-free additive bias (computed once per kv step, shared by all heads).
    bias = jnp.where(m_ref[0] != 0, _MASK_FILL, 0.0).astype(jnp.float32)  # (tq, tk)

    for hh in range(h):  # static unroll; all slices are static lane-dim slices
        q = q_ref[0, :, hh * d_k:(hh + 1) * d_k]        # (tq, d_k) bf16 (scale pre-folded)
        k = k_ref[0, :, hh * d_k:(hh + 1) * d_k]        # (tk, d_k) bf16
        v = v_ref[0, :, hh * d_v:(hh + 1) * d_v]        # (tk, d_v) bf16

        # Contract d_k directly (no in-kernel transpose of k); f32 accumulation.
        s = jax.lax.dot_general(q, k, (((1,), (1,)), ((), ())),
                                preferred_element_type=jnp.float32)       # (tq, tk)
        s = s + bias

        m_prev = m_sc[hh]                                                 # (tq, 1)
        m_new = jnp.maximum(m_prev, jnp.max(s, axis=-1, keepdims=True))
        alpha = jnp.exp(m_prev - m_new)
        p = jnp.exp(s - m_new)                                            # (tq, tk)
        l_sc[hh] = alpha * l_sc[hh] + jnp.sum(p, axis=-1, keepdims=True)
        acc_ref[:, hh * d_v:(hh + 1) * d_v] = (
            alpha * acc_ref[:, hh * d_v:(hh + 1) * d_v]
            + jnp.dot(p.astype(jnp.bfloat16), v, preferred_element_type=jnp.float32))
        m_sc[hh] = m_new

    @pl.when(kv == pl.num_programs(2) - 1)
    def _finalize():
        for hh in range(h):
            # Exact divide; runs once per q tile so the cost is negligible.
            acc_ref[:, hh * d_v:(hh + 1) * d_v] = (
                acc_ref[:, hh * d_v:(hh + 1) * d_v] / l_sc[hh])
        # One lane-dense, unmasked full-width store of the whole (tq, h*d_v) slab.
        o_ref[0] = acc_ref[...].astype(o_ref.dtype)


def pallas_attention(q, k, v, mask_i8, d_k, d_v, h):
    """q:(B,nq,h*d_k) k:(B,nk,h*d_k) v:(B,nk,h*d_v) bf16, mask:(B,nq,nk) int8
    -> (B, nq, h*d_v) bf16 (lane-dense)."""
    B, nq = q.shape[0], q.shape[1]
    nk = k.shape[1]

    tq = _pick_tile(nq, 256, 8)     # 2nd-to-last dim of mask/out blocks: x8 or full
    tk = _pick_tile(nk, 512, 128)   # last dim of mask block: x128 or full

    kernel = functools.partial(_attn_kernel, h=h, d_k=d_k, d_v=d_v)
    cost = pl.CostEstimate(
        flops=2 * B * h * nq * nk * (d_k + d_v),
        transcendentals=B * h * nq * nk,
        bytes_accessed=2 * B * (nq * h * d_k + nk * h * (d_k + d_v) + nq * h * d_v)
                       + B * nq * nk)

    # TODO(synk): scalar-prefetched per-tile any/fully-masked flags could skip the
    # bias add / whole dead tiles for padding-heavy batches (PrefetchScalarGridSpec).
    return pl.pallas_call(
        kernel,
        out_shape=jax.ShapeDtypeStruct((B, nq, h * d_v), jnp.bfloat16),
        grid=(B, nq // tq, nk // tk),
        in_specs=[
            pl.BlockSpec((1, tq, h * d_k), lambda b, qi, ki: (b, qi, 0)),
            pl.BlockSpec((1, tk, h * d_k), lambda b, qi, ki: (b, ki, 0)),
            pl.BlockSpec((1, tk, h * d_v), lambda b, qi, ki: (b, ki, 0)),
            pl.BlockSpec((1, tq, tk),      lambda b, qi, ki: (b, qi, ki)),
        ],
        out_specs=pl.BlockSpec((1, tq, h * d_v), lambda b, qi, ki: (b, qi, 0)),
        scratch_shapes=[
            pltpu.VMEM((tq, h * d_v), jnp.float32),   # lane-dense output accumulator
            pltpu.VMEM((h, tq, 1), jnp.float32),      # running max per head
            pltpu.VMEM((h, tq, 1), jnp.float32),      # running sum per head
        ],
        compiler_params=pltpu.CompilerParams(
            dimension_semantics=("parallel", "parallel", "arbitrary"),
            vmem_limit_bytes=_VMEM_LIMIT),
        cost_estimate=cost,
    )(q, k, v, mask_i8)


# ------------------------------------------------------------------
# Module wrapper (parameter setup + free reshapes only — no transposes)
# ------------------------------------------------------------------
def xavier_uniform(key, shape):
    fan_out, fan_in = shape
    limit = math.sqrt(6.0 / (fan_in + fan_out))
    return jax.random.uniform(key, shape, jnp.float32, -limit, limit)


class ScaledDotProductAttentionPallas:
    def __init__(self, d_model, d_k, d_v, h, key):
        self.d_model, self.d_k, self.d_v, self.h = d_model, d_k, d_v, h
        kq, kk, kv, ko = jax.random.split(key, 4)
        scale = 1.0 / math.sqrt(d_k)
        # nn.Linear weights are (out_features, in_features); keep (d_in, d_out)
        # transposes so the MXU path never transposes.  f32 masters are kept for the
        # reference; the kernels consume bf16 copies, with 1/sqrt(d_k) folded into W_q.
        self.w_q_t = xavier_uniform(kq, (h * d_k, d_model)).T
        self.w_k_t = xavier_uniform(kk, (h * d_k, d_model)).T
        self.w_v_t = xavier_uniform(kv, (h * d_v, d_model)).T
        self.w_o_t = xavier_uniform(ko, (d_model, h * d_v)).T
        self.b_q = jnp.zeros((h * d_k,), jnp.float32)
        self.b_k = jnp.zeros((h * d_k,), jnp.float32)
        self.b_v = jnp.zeros((h * d_v,), jnp.float32)
        self.b_o = jnp.zeros((d_model,), jnp.float32)
        self.w_q_t_b = (self.w_q_t * scale).astype(jnp.bfloat16)   # scale folded
        self.b_q_s = self.b_q * scale
        self.w_k_t_b = self.w_k_t.astype(jnp.bfloat16)
        self.w_v_t_b = self.w_v_t.astype(jnp.bfloat16)
        self.w_o_t_b = self.w_o_t.astype(jnp.bfloat16)

    def __call__(self, queries, keys, values, attention_mask):
        # queries: (B, nq, d_model), keys/values: (B, nk, d_model)
        # attention_mask: bool, broadcastable to (B, 1, nq, nk); True == masked
        B, nq, _ = queries.shape
        nk = keys.shape[1]
        h, d_k, d_v, d_model = self.h, self.d_k, self.d_v, self.d_model

        q_in = queries.reshape(B * nq, d_model).astype(jnp.bfloat16)
        k_in = keys.reshape(B * nk, d_model).astype(jnp.bfloat16)
        v_in = values.reshape(B * nk, d_model).astype(jnp.bfloat16)
        q = pallas_linear(q_in, self.w_q_t_b, self.b_q_s, jnp.bfloat16)
        k = pallas_linear(k_in, self.w_k_t_b, self.b_k, jnp.bfloat16)
        v = pallas_linear(v_in, self.w_v_t_b, self.b_v, jnp.bfloat16)
        # Lane-dense (B, n, h*d) views — pure reshapes, no transposes / HBM copies.
        q = q.reshape(B, nq, h * d_k)
        k = k.reshape(B, nk, h * d_k)
        v = v.reshape(B, nk, h * d_v)

        # Head-free int8 mask (no head-broadcast DMA traffic).
        # TODO(synk): head-dependent masks would need a head axis in the mask stream.
        m = jnp.asarray(attention_mask)
        if m.ndim == 4:
            if m.shape[1] != 1:
                raise ValueError(
                    "head-dependent attention masks (mask.shape[1] != 1) are not "
                    "supported by this kernel; provide a (B, 1, nq, nk) padding mask")
            m = m[:, 0]
        mask = jnp.broadcast_to(m, (B, nq, nk)).astype(jnp.int8)

        out = pallas_attention(q, k, v, mask, d_k, d_v, h)   # (B, nq, h*d_v) bf16
        out = pallas_linear(out.reshape(B * nq, h * d_v), self.w_o_t_b, self.b_o,
                            jnp.float32)
        return out.reshape(B, nq, d_model)


# ------------------------------------------------------------------
# Pure-JAX reference (mirrors the PyTorch forward) for a correctness check
# ------------------------------------------------------------------
def _reference(module, queries, keys, values, attention_mask):
    B, nq, _ = queries.shape
    nk = keys.shape[1]
    h, d_k, d_v = module.h, module.d_k, module.d_v
    q = (queries @ module.w_q_t + module.b_q).reshape(B, nq, h, d_k).transpose(0, 2, 1, 3)
    k = (keys @ module.w_k_t + module.b_k).reshape(B, nk, h, d_k).transpose(0, 2, 3, 1)
    v = (values @ module.w_v_t + module.b_v).reshape(B, nk, h, d_v).transpose(0, 2, 1, 3)
    att = jnp.matmul(q, k) / math.sqrt(d_k)
    att = jnp.where(jnp.broadcast_to(attention_mask, att.shape), -jnp.inf, att)
    att = jax.nn.softmax(att, axis=-1)
    out = jnp.matmul(att, v).transpose(0, 2, 1, 3).reshape(B, nq, h * d_v)
    return out @ module.w_o_t + module.b_o


if __name__ == "__main__":
    B, nq, nk = 2, 8, 8
    d_model, d_k, d_v, h = 32, 16, 16, 4

    key = jax.random.PRNGKey(0)
    kparam, kq, kk, kv = jax.random.split(key, 4)

    module = ScaledDotProductAttentionPallas(d_model, d_k, d_v, h, kparam)

    queries = jax.random.normal(kq, (B, nq, d_model), jnp.float32)
    keys = jax.random.normal(kk, (B, nk, d_model), jnp.float32)
    values = jax.random.normal(kv, (B, nk, d_model), jnp.float32)
    # Mask out the last two key positions for every query (True == masked),
    # broadcast over heads like a typical padding mask.
    attention_mask = jnp.zeros((B, 1, nq, nk), jnp.bool_).at[:, :, :, nk - 2:].set(True)

    out = module(queries, keys, values, attention_mask)
    jax.block_until_ready(out)
    assert out.shape == (B, nq, d_model)
    assert bool(jnp.all(jnp.isfinite(out)))

    ref = _reference(module, queries, keys, values, attention_mask)
    err = float(jnp.max(jnp.abs(out - ref)))
    assert err < 0.15, f"max abs err vs reference too large: {err}"
    print("KERNEL_OK")
</pallas_src>

<mosaic_0001>
module attributes {stable_mosaic.version = 11 : i64} {
  func.func @_linear_kernel(%arg0: i32, %arg1: i32, %arg2: memref<16x32xbf16, #tpu.memory_space<vmem>>, %arg3: memref<32x64xbf16, #tpu.memory_space<vmem>>, %arg4: memref<1x64xf32, #tpu.memory_space<vmem>>, %arg5: memref<16x64xbf16, #tpu.memory_space<vmem>>) attributes {dimension_semantics = [#tpu.dimension_semantics<parallel>, #tpu.dimension_semantics<parallel>], iteration_bounds = array<i64: 1, 1>, scalar_prefetch = 0 : i64, scratch_operands = 0 : i64, tpu.core_type = #tpu.core_type<tc>, window_params = [{transform_indices = @transform_0, window_bounds = array<i64: 16, 32>}, {transform_indices = @transform_1, window_bounds = array<i64: 32, 64>}, {transform_indices = @transform_2, window_bounds = array<i64: 1, 64>}, {transform_indices = @transform_3, window_bounds = array<i64: 16, 64>}]} {
    %c0 = arith.constant 0 : index
    %c0_0 = arith.constant 0 : index
    %0 = vector.load %arg2[%c0, %c0_0] : memref<16x32xbf16, #tpu.memory_space<vmem>>, vector<16x32xbf16>
    %c0_1 = arith.constant 0 : index
    %c0_2 = arith.constant 0 : index
    %1 = vector.load %arg3[%c0_1, %c0_2] : memref<32x64xbf16, #tpu.memory_space<vmem>>, vector<32x64xbf16>
    %cst = arith.constant dense<0.000000e+00> : vector<16x64xf32>
    %2 = tpu.matmul %0, %1, %cst {dimension_numbers = #tpu.dot_dimension_numbers<[1], [0], [0], [1], [0, 0, 1, 1], [], []>} : vector<16x32xbf16>, vector<32x64xbf16>, vector<16x64xf32> -> vector<16x64xf32>
    %c0_3 = arith.constant 0 : index
    %c0_4 = arith.constant 0 : index
    %3 = vector.load %arg4[%c0_3, %c0_4] : memref<1x64xf32, #tpu.memory_space<vmem>>, vector<1x64xf32>
    %4 = vector.broadcast %3 : vector<1x64xf32> to vector<16x64xf32>
    %5 = arith.addf %2, %4 : vector<16x64xf32>
    %6 = arith.truncf %5 : vector<16x64xf32> to vector<16x64xbf16>
    %c0_5 = arith.constant 0 : index
    %c0_6 = arith.constant 0 : index
    %7 = vector.load %arg5[%c0_5, %c0_6] : memref<16x64xbf16, #tpu.memory_space<vmem>>, vector<16x64xbf16>
    tpu.vector_store %arg5[%c0_5, %c0_6], %6 {strides = array<i32>} : memref<16x64xbf16, #tpu.memory_space<vmem>>, vector<16x64xbf16>,
    return
  }
  func.func @transform_0(%arg0: i32, %arg1: i32) -> (i32, i32) {
    %c0_i32 = arith.constant 0 : i32
    %c0_i32_0 = arith.constant 0 : i32
    return %arg0, %c0_i32 : i32, i32
  }
  func.func @transform_1(%arg0: i32, %arg1: i32) -> (i32, i32) {
    %c0_i32 = arith.constant 0 : i32
    %c0_i32_0 = arith.constant 0 : i32
    return %c0_i32, %arg1 : i32, i32
  }
  func.func @transform_2(%arg0: i32, %arg1: i32) -> (i32, i32) {
    %c0_i32 = arith.constant 0 : i32
    %c0_i32_0 = arith.constant 0 : i32
    return %c0_i32, %arg1 : i32, i32
  }
  func.func @transform_3(%arg0: i32, %arg1: i32) -> (i32, i32) {
    %c0_i32 = arith.constant 0 : i32
    return %arg0, %arg1 : i32, i32
  }
}

</mosaic_0001>

<llo_original>
// kernel: tpu_custom_call.1
$region0: #{tpu_custom_call.1}
  #allocation0 [shape = 'u32[]', space=smem, size = 0x4, offset = 0x4, fixed_abs, tag = 'smem constant byte address 0x4 - core index']
  #allocation1 [shape = 'u32[144,128]{1,0:T(1,128)}', space=vmem, size = 0x12000, scoped, tag = 'internal scratch']
  %s0 = inlined_call_operand.hbm [shape: bf16[16,32], index: 0, kind: input, shape index: {}]
  %s1 = inlined_call_operand.hbm [shape: bf16[32,64], index: 1, kind: input, shape index: {}]
  %s2 = inlined_call_operand.vmem [shape: f32[1,64], index: 2, kind: input, shape index: {}]
  %s3 = inlined_call_operand.hbm [shape: bf16[16,64], index: 3, kind: output, shape index: {}]
  %s4 = sld [smem:[#allocation0]]
  $region30: #{tpu_custom_call.1} parent=0
    _
  %s6 = ssub.s32 1, %s4
  %s7 = scalar_select 0, %s6, %s4
  $region1: #{tpu_custom_call.1} parent=0
    #allocation2 [shape = 'u8[4096]{0}', space=vmem, size = 0x1000, scoped, tag = 'input window, operand 0, single buffered']
    #allocation3 [shape = 's32[1]{0}', space=sflag, size = 0x4, scoped, tag = 'scoped memory for tpu_custom_call.1']
    #allocation4 [shape = 's32[1]{0}', space=sflag, size = 0x4, scoped, tag = 'scoped memory for tpu_custom_call.1']
    #allocation5 [shape = 'u8[8192]{0}', space=vmem, size = 0x2000, scoped, tag = 'input window, operand 1, single buffered']
    #allocation6 [shape = 's32[1]{0}', space=sflag, size = 0x4, scoped, tag = 'scoped memory for tpu_custom_call.1']
    #allocation7 [shape = 'u8[4096]{0}', space=vmem, size = 0x1000, scoped, tag = 'output window, operand 0, single buffered']
    %8 = vsyncpa [#allocation3], 0
    %9 = vsyncpa [#allocation6], 0
    %10 = vsyncpa [#allocation4], 0
    // Predicated region
    $region2: #{tpu_custom_call.1} parent=1 // pred_check
      _
    $region3: #{tpu_custom_call.1} parent=1 // pred_check_branch
      %12 = sbr.rel (0) target = $region5
    $region4: #{tpu_custom_call.1} parent=1 // pred_region
      %s14 = ssub.s32 128, 128
      %15 = vsyncadd [#allocation3], %s14
      %s16 = sshll.u32 [#allocation2], 4
      %s17 = int_to_ptr.vmem [resolvable:$true] %s16
      %22 = dma.hbm_to_vmem [thread:$0]  %s0, 128, %s17, [#allocation3], 64, 64, 4
    $region5: #{tpu_custom_call.1} parent=1 // pred_fallthru
      _
    // Predicated region
    $region6: #{tpu_custom_call.1} parent=1 // pred_check
      _
    $region7: #{tpu_custom_call.1} parent=1 // pred_check_branch
      %24 = sbr.rel (0) target = $region9
    $region8: #{tpu_custom_call.1} parent=1 // pred_region
      %s26 = ssub.s32 256, 256
      %27 = vsyncadd [#allocation6], %s26
      %s28 = sshll.u32 [#allocation5], 4
      %s29 = int_to_ptr.vmem [resolvable:$true] %s28
      %34 = dma.hbm_to_vmem [thread:$0]  %s1, 256, %s29, [#allocation6], 64, 64, 4
    $region9: #{tpu_custom_call.1} parent=1 // pred_fallthru
      _
    // Predicated region
    $region10: #{tpu_custom_call.1} parent=1 // pred_check
      _
    $region11: #{tpu_custom_call.1} parent=1 // pred_check_branch
      %36 = sbr.rel (0) target = $region13
    $region12: #{tpu_custom_call.1} parent=1 // pred_region
      _
    $region13: #{tpu_custom_call.1} parent=1 // pred_fallthru
      _
    // Predicated region
    $region14: #{tpu_custom_call.1} parent=1 // pred_check
      _
    $region15: #{tpu_custom_call.1} parent=1 // pred_check_branch
      %38 = sbr.rel (0) target = $region17
    $region16: #{tpu_custom_call.1} parent=1 // pred_region
      %39 = dma.done [#allocation3], 128
    $region17: #{tpu_custom_call.1} parent=1 // pred_fallthru
      _
    // Predicated region
    $region18: #{tpu_custom_call.1} parent=1 // pred_check
      _
    $region19: #{tpu_custom_call.1} parent=1 // pred_check_branch
      %41 = sbr.rel (0) target = $region21
    $region20: #{tpu_custom_call.1} parent=1 // pred_region
      %42 = dma.done [#allocation6], 256
    $region21: #{tpu_custom_call.1} parent=1 // pred_fallthru
      _
    %v44 = vld [vmem:[#allocation2] sm:$0xf]
    %v45 = vld [vmem:[#allocation2 + $0x4] sm:$0xf]
    %v46 = vld [vmem:[#allocation5] sm:$0xf]
    %v47 = vld [vmem:[#allocation5 + $0x4] sm:$0xf]
    %v48 = vld [vmem:[#allocation5 + $0x8] sm:$0xf]
    %v49 = vld [vmem:[#allocation5 + $0xc] sm:$0xf]
    %v50 = vld [vmem:[%s2] sm:$0x1]
    %v52 = vlaneseq
    %v53 = vshrl.u32 %v52, 7
    %v54 = vsub.s32 0, %v53
    %v55 = vrot.slane %v50, %v54
    %v59 = vunpack.c.l.b16 %v44
    %v60 = vunpack.c.l.b16 %v45
    %v61 = vpack.c.b16 %v60, %v59
    %v66 = vunpack.c.l.b16 %v46
    %v67 = vunpack.c.l.b16 %v47
    %v68 = vunpack.c.l.b16 %v48
    %v69 = vunpack.c.l.b16 %v49
    %v70 = vpack.c.b16 %v67, %v66
    %v71 = vpack.c.b16 %v69, %v68
    %vm74 = vcmask 261120
    %v76 = vsel %vm74, %v61, 0
    %78 = vmatprep.subr.bf16.mxu0 0
    %79 = vmatpush1.bf16.msra.mxu0 %v70
    %80 = vmatprep.subr.bf16.mxu0 0
    %81 = vmatpush1.bf16.msra.mxu0 %v71
    %82 = vmatprep.subr.bf16.mxu0 0
    %83 = vmatpush1.bf16.msra.mxu0 0
    %84 = vmatprep.subr.bf16.mxu0 0
    %85 = vmatpush1.bf16.msra.mxu0 0
    %86 = vmatprep.subr.bf16.mxu0 0
    %87 = vmatpush1.bf16.msra.mxu0 0
    %88 = vmatprep.subr.bf16.mxu0 0
    %89 = vmatpush1.bf16.msra.mxu0 0
    %90 = vmatprep.subr.bf16.mxu0 0
    %91 = vmatpush1.bf16.msra.mxu0 0
    %92 = vmatprep.subr.bf16.mxu0 0
    %93 = vmatpush1.bf16.msra.mxu0 0
    %94 = vmatprep.subr.bf16.mxu0 0
    %95 = vmatpush1.bf16.msra.mxu0 0
    %96 = vmatprep.subr.bf16.mxu0 0
    %97 = vmatpush1.bf16.msra.mxu0 0
    %98 = vmatprep.subr.bf16.mxu0 0
    %99 = vmatpush1.bf16.msra.mxu0 0
    %100 = vmatprep.subr.bf16.mxu0 0
    %101 = vmatpush1.bf16.msra.mxu0 0
    %102 = vmatprep.subr.bf16.mxu0 0
    %103 = vmatpush1.bf16.msra.mxu0 0
    %104 = vmatprep.subr.bf16.mxu0 0
    %105 = vmatpush1.bf16.msra.mxu0 0
    %106 = vmatprep.subr.bf16.mxu0 0
    %107 = vmatpush1.bf16.msra.mxu0 0
    %108 = vmatprep.subr.bf16.mxu0 0
    %109 = vmatpush1.bf16.msra.mxu0 0
    %110 = vmatprep.mubr.bf16.mxu0 0
    %111 = vmatmul.mubr.bf16.gmra.mrb[0].mxu0 %v76
    %v112 = vpop.f32.mrb[0].mxu0
    %v113 = vadd.f32 %v55, %v112
    %v114 = vpop.f32.mrb[0].mxu0
    %v115 = vpop.f32.mrb[0].mxu0
    %v116 = vadd.f32 %v55, %v115
    %v117 = vpop.f32.mrb[0].mxu0
    %118 = vdwg.mxu0
    %v119 = vpack.c.bf16 %v116, %v113
    %v121 = vunpack.c.l.b16 %v119
    %v122 = vunpack.c.h.b16 %v119
    %v123 = vpack.c.b16 %v121, %v121
    %v124 = vpack.c.b16 %v122, %v122
    %vm127 = vcmask 519168
    %128 = vst.msk [vmem:[#allocation7] sm:$0xf] %vm127, %v123
    %129 = vst.msk [vmem:[#allocation7 + $0x4] sm:$0xf] %vm127, %v124
    // Predicated region
    $region22: #{tpu_custom_call.1} parent=1 // pred_check
      _
    $region23: #{tpu_custom_call.1} parent=1 // pred_check_branch
      %131 = sbr.rel (0) target = $region25
    $region24: #{tpu_custom_call.1} parent=1 // pred_region
      %s133 = ssub.s32 128, 128
      %134 = vsyncadd [#allocation4], %s133
      %s135 = sshll.u32 [#allocation7], 4
      %s136 = int_to_ptr.vmem [resolvable:$true] %s135
      %141 = dma.vmem_to_hbm [thread:$0]  %s136, 128, %s3, [#allocation4], 64, 64, 4
    $region25: #{tpu_custom_call.1} parent=1 // pred_fallthru
      _
    // Predicated region
    $region26: #{tpu_custom_call.1} parent=1 // pred_check
      _
    $region27: #{tpu_custom_call.1} parent=1 // pred_check_branch
      %143 = sbr.rel (0) target = $region29
    $region28: #{tpu_custom_call.1} parent=1 // pred_region
      %144 = dma.done [#allocation4], 128
    $region29: #{tpu_custom_call.1} parent=1 // pred_fallthru
      _
    %145 = vsyncpa [#allocation3], 1
    %146 = vsyncpa [#allocation6], 1
    %147 = vsyncpa [#allocation4], 1

</llo_original>
